<compile_context>
chip_gen: v7x
topology: tpu7x:2x2x1
jax: 0.10.0
libtpu: 0.0.40
codegen_flags: <defaults>
</compile_context>

<pallas_src>
import jax
import jax.numpy as jnp
from jax.experimental import pallas as pl
from jax.experimental.pallas import tpu as pltpu

HID_SIZE = 10


def _cdiv(a, b):
    return (a + b - 1) // b


def _round_up(n, m):
    return _cdiv(n, m) * m


def qnet_kernel(x_ref, w1_ref, b1_ref, wp_ref, bp_ref, wv_ref, bv_ref,
                policy_ref, value_ref):
    # base: Linear + ReLU      x: (TB, obs), w1: (obs, HID)
    x = x_ref[...]
    h = jnp.dot(x, w1_ref[...], preferred_element_type=jnp.float32) + b1_ref[...]
    h = jnp.maximum(h, 0.0)

    # policy head: Linear + Softmax over the (exact-width) act_size lanes
    logits = jnp.dot(h, wp_ref[...], preferred_element_type=jnp.float32) + bp_ref[...]
    m = jnp.max(logits, axis=-1, keepdims=True)
    e = jnp.exp(logits - m)
    denom = jnp.sum(e, axis=-1, keepdims=True)
    policy_ref[...] = e * pl.reciprocal(denom, approx=False)

    # value head: Linear
    value_ref[...] = jnp.dot(h, wv_ref[...], preferred_element_type=jnp.float32) + bv_ref[...]


def _select_batch_tile(batch, block_batch, min_steps=2):
    """Pick a batch tile: multiple of 8, <= block_batch, aiming for >= min_steps
    grid steps (v7x has 2 TCs) while keeping padding below one sublane group."""
    batch_r8 = _round_up(max(batch, 1), 8)
    n_steps = max(min_steps, _cdiv(batch_r8, block_batch))
    tb = min(_round_up(_cdiv(batch_r8, n_steps), 8), batch_r8)
    n_steps = _cdiv(batch_r8, tb)
    return tb, n_steps * tb


def qnet_forward(x, params, *, block_batch=2048):
    w1, b1, wp, bp, wv, bv = params
    batch, obs_size = x.shape
    act_size = wp.shape[1]

    tb, batch_pad = _select_batch_tile(batch, block_batch)
    x_pad = x if batch_pad == batch else jnp.pad(x, ((0, batch_pad - batch), (0, 0)))

    policy, value = pl.pallas_call(
        qnet_kernel,
        out_shape=(
            jax.ShapeDtypeStruct((batch_pad, act_size), jnp.float32),
            jax.ShapeDtypeStruct((batch_pad, 1), jnp.float32),
        ),
        grid=(batch_pad // tb,),
        in_specs=[
            pl.BlockSpec((tb, obs_size), lambda i: (i, 0)),          # x: blocked over batch
            pl.BlockSpec((obs_size, HID_SIZE), lambda i: (0, 0)),    # w1: resident
            pl.BlockSpec((1, HID_SIZE), lambda i: (0, 0)),           # b1: resident
            pl.BlockSpec((HID_SIZE, act_size), lambda i: (0, 0)),    # wp: resident
            pl.BlockSpec((1, act_size), lambda i: (0, 0)),           # bp: resident
            pl.BlockSpec((HID_SIZE, 1), lambda i: (0, 0)),           # wv: resident
            pl.BlockSpec((1, 1), lambda i: (0, 0)),                  # bv: resident
        ],
        out_specs=(
            pl.BlockSpec((tb, act_size), lambda i: (i, 0)),          # policy (narrow)
            pl.BlockSpec((tb, 1), lambda i: (i, 0)),                 # value  (narrow)
        ),
        compiler_params=pltpu.CompilerParams(
            dimension_semantics=("parallel",),
        ),
    )(x_pad, w1, b1, wp, bp, wv, bv)

    if batch_pad != batch:
        policy = policy[:batch]
        value = value[:batch]
    return policy, value


def init_params(key, obs_size, act_size):
    """Deterministic init mimicking PyTorch Linear (uniform +/- 1/sqrt(fan_in)).
    Weights stored as (in_features, out_features) so the kernel computes x @ W + b."""
    ks = jax.random.split(key, 6)

    def lin(kw, kb, fan_in, fan_out):
        bound = 1.0 / jnp.sqrt(jnp.float32(fan_in))
        w = jax.random.uniform(kw, (fan_in, fan_out), jnp.float32, -bound, bound)
        b = jax.random.uniform(kb, (1, fan_out), jnp.float32, -bound, bound)
        return w, b

    w1, b1 = lin(ks[0], ks[1], obs_size, HID_SIZE)
    wp, bp = lin(ks[2], ks[3], HID_SIZE, act_size)
    wv, bv = lin(ks[4], ks[5], HID_SIZE, 1)
    return (w1, b1, wp, bp, wv, bv)


def qnet_reference(x, params):
    w1, b1, wp, bp, wv, bv = params
    h = jnp.maximum(x @ w1 + b1, 0.0)
    logits = h @ wp + bp
    policy = jax.nn.softmax(logits, axis=-1)
    value = h @ wv + bv
    return policy, value


if __name__ == "__main__":
    key = jax.random.PRNGKey(0)
    batch, obs_size, act_size = 2, 8, 4

    kx, kp = jax.random.split(key)
    x = jax.random.normal(kx, (batch, obs_size), jnp.float32)
    params = init_params(kp, obs_size, act_size)

    policy, value = qnet_forward(x, params)
    jax.block_until_ready((policy, value))

    ref_policy, ref_value = qnet_reference(x, params)
    assert policy.shape == (batch, act_size)
    assert value.shape == (batch, 1)
    assert jnp.allclose(policy, ref_policy, atol=1e-5, rtol=1e-5)
    assert jnp.allclose(value, ref_value, atol=1e-5, rtol=1e-5)
    assert jnp.allclose(jnp.sum(policy, axis=-1), 1.0, atol=1e-5)

    # also exercise a non-aligned, multi-step-grid batch to cover padding/tiling paths
    x_big = jax.random.normal(kx, (600, obs_size), jnp.float32)
    p_big, v_big = qnet_forward(x_big, params)
    jax.block_until_ready((p_big, v_big))
    rp_big, rv_big = qnet_reference(x_big, params)
    assert jnp.allclose(p_big, rp_big, atol=1e-5, rtol=1e-5)
    assert jnp.allclose(v_big, rv_big, atol=1e-5, rtol=1e-5)

    print("KERNEL_OK")
</pallas_src>

<mosaic_0001>
module attributes {stable_mosaic.version = 11 : i64} {
  func.func @qnet_kernel(%arg0: i32, %arg1: memref<8x8xf32, #tpu.memory_space<vmem>>, %arg2: memref<8x10xf32, #tpu.memory_space<vmem>>, %arg3: memref<1x10xf32, #tpu.memory_space<vmem>>, %arg4: memref<10x4xf32, #tpu.memory_space<vmem>>, %arg5: memref<1x4xf32, #tpu.memory_space<vmem>>, %arg6: memref<10x1xf32, #tpu.memory_space<vmem>>, %arg7: memref<1x1xf32, #tpu.memory_space<vmem>>, %arg8: memref<8x4xf32, #tpu.memory_space<vmem>>, %arg9: memref<8x1xf32, #tpu.memory_space<vmem>>) attributes {dimension_semantics = [#tpu.dimension_semantics<parallel>], iteration_bounds = array<i64: 1>, scalar_prefetch = 0 : i64, scratch_operands = 0 : i64, tpu.core_type = #tpu.core_type<tc>, window_params = [{transform_indices = @transform_0, window_bounds = array<i64: 8, 8>}, {pipeline_mode = #tpu.pipeline_mode<synchronous>, transform_indices = @transform_1, window_bounds = array<i64: 8, 10>}, {pipeline_mode = #tpu.pipeline_mode<synchronous>, transform_indices = @transform_2, window_bounds = array<i64: 1, 10>}, {pipeline_mode = #tpu.pipeline_mode<synchronous>, transform_indices = @transform_3, window_bounds = array<i64: 10, 4>}, {pipeline_mode = #tpu.pipeline_mode<synchronous>, transform_indices = @transform_4, window_bounds = array<i64: 1, 4>}, {pipeline_mode = #tpu.pipeline_mode<synchronous>, transform_indices = @transform_5, window_bounds = array<i64: 10, 1>}, {pipeline_mode = #tpu.pipeline_mode<synchronous>, transform_indices = @transform_6, window_bounds = array<i64: 1, 1>}, {transform_indices = @transform_7, window_bounds = array<i64: 8, 4>}, {transform_indices = @transform_8, window_bounds = array<i64: 8, 1>}]} {
    %c0 = arith.constant 0 : index
    %c0_0 = arith.constant 0 : index
    %0 = vector.load %arg1[%c0, %c0_0] : memref<8x8xf32, #tpu.memory_space<vmem>>, vector<8x8xf32>
    %c0_1 = arith.constant 0 : index
    %c0_2 = arith.constant 0 : index
    %1 = vector.load %arg2[%c0_1, %c0_2] : memref<8x10xf32, #tpu.memory_space<vmem>>, vector<8x10xf32>
    %cst = arith.constant dense<0.000000e+00> : vector<8x10xf32>
    %2 = tpu.matmul %0, %1, %cst {dimension_numbers = #tpu.dot_dimension_numbers<[1], [0], [0], [1], [0, 0, 1, 1], [], []>} : vector<8x8xf32>, vector<8x10xf32>, vector<8x10xf32> -> vector<8x10xf32>
    %c0_3 = arith.constant 0 : index
    %c0_4 = arith.constant 0 : index
    %3 = vector.load %arg3[%c0_3, %c0_4] : memref<1x10xf32, #tpu.memory_space<vmem>>, vector<1x10xf32>
    %4 = vector.broadcast %3 : vector<1x10xf32> to vector<8x10xf32>
    %5 = arith.addf %2, %4 : vector<8x10xf32>
    %cst_5 = arith.constant 0.000000e+00 : f32
    %6 = vector.broadcast %cst_5 : f32 to vector<8x10xf32>
    %7 = arith.maximumf %5, %6 : vector<8x10xf32>
    %c0_6 = arith.constant 0 : index
    %c0_7 = arith.constant 0 : index
    %8 = vector.load %arg4[%c0_6, %c0_7] : memref<10x4xf32, #tpu.memory_space<vmem>>, vector<10x4xf32>
    %cst_8 = arith.constant dense<0.000000e+00> : vector<8x4xf32>
    %9 = tpu.matmul %7, %8, %cst_8 {dimension_numbers = #tpu.dot_dimension_numbers<[1], [0], [0], [1], [0, 0, 1, 1], [], []>} : vector<8x10xf32>, vector<10x4xf32>, vector<8x4xf32> -> vector<8x4xf32>
    %c0_9 = arith.constant 0 : index
    %c0_10 = arith.constant 0 : index
    %10 = vector.load %arg5[%c0_9, %c0_10] : memref<1x4xf32, #tpu.memory_space<vmem>>, vector<1x4xf32>
    %11 = vector.broadcast %10 : vector<1x4xf32> to vector<8x4xf32>
    %12 = arith.addf %9, %11 : vector<8x4xf32>
    %cst_11 = arith.constant dense<0xFF800000> : vector<8xf32>
    %13 = vector.multi_reduction <maximumf>, %12, %cst_11 [1] : vector<8x4xf32> to vector<8xf32>
    %14 = vector.shape_cast %13 : vector<8xf32> to vector<8x1xf32>
    %15 = vector.broadcast %14 : vector<8x1xf32> to vector<8x4xf32>
    %16 = arith.subf %12, %15 : vector<8x4xf32>
    %17 = math.exp %16 : vector<8x4xf32>
    %cst_12 = arith.constant dense<0.000000e+00> : vector<8xf32>
    %18 = vector.multi_reduction <add>, %17, %cst_12 [1] : vector<8x4xf32> to vector<8xf32>
    %19 = vector.shape_cast %18 : vector<8xf32> to vector<8x1xf32>
    %20 = tpu.reciprocal %19 : vector<8x1xf32> -> vector<8x1xf32>
    %21 = vector.broadcast %20 : vector<8x1xf32> to vector<8x4xf32>
    %22 = arith.mulf %17, %21 : vector<8x4xf32>
    %c0_13 = arith.constant 0 : index
    %c0_14 = arith.constant 0 : index
    %23 = vector.load %arg8[%c0_13, %c0_14] : memref<8x4xf32, #tpu.memory_space<vmem>>, vector<8x4xf32>
    tpu.vector_store %arg8[%c0_13, %c0_14], %22 {strides = array<i32>} : memref<8x4xf32, #tpu.memory_space<vmem>>, vector<8x4xf32>,
    %c0_15 = arith.constant 0 : index
    %c0_16 = arith.constant 0 : index
    %24 = vector.load %arg6[%c0_15, %c0_16] : memref<10x1xf32, #tpu.memory_space<vmem>>, vector<10x1xf32>
    %cst_17 = arith.constant dense<0.000000e+00> : vector<8x1xf32>
    %25 = tpu.matmul %7, %24, %cst_17 {dimension_numbers = #tpu.dot_dimension_numbers<[1], [0], [0], [1], [0, 0, 1, 1], [], []>} : vector<8x10xf32>, vector<10x1xf32>, vector<8x1xf32> -> vector<8x1xf32>
    %c0_18 = arith.constant 0 : index
    %c0_19 = arith.constant 0 : index
    %26 = vector.load %arg7[%c0_18, %c0_19] : memref<1x1xf32, #tpu.memory_space<vmem>>, vector<1x1xf32>
    %27 = vector.broadcast %26 : vector<1x1xf32> to vector<8x1xf32>
    %28 = arith.addf %25, %27 : vector<8x1xf32>
    %c0_20 = arith.constant 0 : index
    %c0_21 = arith.constant 0 : index
    %29 = vector.load %arg9[%c0_20, %c0_21] : memref<8x1xf32, #tpu.memory_space<vmem>>, vector<8x1xf32>
    tpu.vector_store %arg9[%c0_20, %c0_21], %28 {strides = array<i32>} : memref<8x1xf32, #tpu.memory_space<vmem>>, vector<8x1xf32>,
    return
  }
  func.func @transform_0(%arg0: i32) -> (i32, i32) {
    %c0_i32 = arith.constant 0 : i32
    %c0_i32_0 = arith.constant 0 : i32
    return %arg0, %c0_i32 : i32, i32
  }
  func.func @transform_1(%arg0: i32) -> (i32, i32) {
    %c0_i32 = arith.constant 0 : i32
    %c0_i32_0 = arith.constant 0 : i32
    %c0_i32_1 = arith.constant 0 : i32
    return %c0_i32, %c0_i32_0 : i32, i32
  }
  func.func @transform_2(%arg0: i32) -> (i32, i32) {
    %c0_i32 = arith.constant 0 : i32
    %c0_i32_0 = arith.constant 0 : i32
    %c0_i32_1 = arith.constant 0 : i32
    return %c0_i32, %c0_i32_0 : i32, i32
  }
  func.func @transform_3(%arg0: i32) -> (i32, i32) {
    %c0_i32 = arith.constant 0 : i32
    %c0_i32_0 = arith.constant 0 : i32
    %c0_i32_1 = arith.constant 0 : i32
    return %c0_i32, %c0_i32_0 : i32, i32
  }
  func.func @transform_4(%arg0: i32) -> (i32, i32) {
    %c0_i32 = arith.constant 0 : i32
    %c0_i32_0 = arith.constant 0 : i32
    %c0_i32_1 = arith.constant 0 : i32
    return %c0_i32, %c0_i32_0 : i32, i32
  }
  func.func @transform_5(%arg0: i32) -> (i32, i32) {
    %c0_i32 = arith.constant 0 : i32
    %c0_i32_0 = arith.constant 0 : i32
    %c0_i32_1 = arith.constant 0 : i32
    return %c0_i32, %c0_i32_0 : i32, i32
  }
  func.func @transform_6(%arg0: i32) -> (i32, i32) {
    %c0_i32 = arith.constant 0 : i32
    %c0_i32_0 = arith.constant 0 : i32
    %c0_i32_1 = arith.constant 0 : i32
    return %c0_i32, %c0_i32_0 : i32, i32
  }
  func.func @transform_7(%arg0: i32) -> (i32, i32) {
    %c0_i32 = arith.constant 0 : i32
    %c0_i32_0 = arith.constant 0 : i32
    return %arg0, %c0_i32 : i32, i32
  }
  func.func @transform_8(%arg0: i32) -> (i32, i32) {
    %c0_i32 = arith.constant 0 : i32
    %c0_i32_0 = arith.constant 0 : i32
    return %arg0, %c0_i32 : i32, i32
  }
}

</mosaic_0001>

<llo_original>
// kernel: tpu_custom_call.1
$region0: #{tpu_custom_call.1}
  #allocation0 [shape = 'u32[]', space=smem, size = 0x4, offset = 0x4, fixed_abs, tag = 'smem constant byte address 0x4 - core index']
  #allocation1 [shape = 'u32[144,128]{1,0:T(1,128)}', space=vmem, size = 0x12000, scoped, tag = 'internal scratch']
  #allocation2 [shape = 'f32[1,1]{1,0:T(1,128)S(1)}', space=vmem, size = 0x200, scoped, tag = 'scoped memory for tpu_custom_call.1']
  %s0 = inlined_call_operand.vmem [shape: f32[8,8], index: 0, kind: input, shape index: {}]
  %s1 = inlined_call_operand.vmem [shape: f32[8,10], index: 1, kind: input, shape index: {}]
  %s2 = inlined_call_operand.vmem [shape: f32[1,10], index: 2, kind: input, shape index: {}]
  %s3 = inlined_call_operand.vmem [shape: f32[10,4], index: 3, kind: input, shape index: {}]
  %s4 = inlined_call_operand.vmem [shape: f32[1,4], index: 4, kind: input, shape index: {}]
  %s5 = inlined_call_operand.vmem [shape: f32[10,1], index: 5, kind: input, shape index: {}]
  %s6 = inlined_call_operand.<no memory space> [shape: f32[1,1], index: 6, kind: input, shape index: {}]
  %s7 = inlined_call_operand.vmem [shape: f32[8,4], index: 7, kind: output, shape index: {0}]
  %s8 = inlined_call_operand.vmem [shape: f32[8,1], index: 8, kind: output, shape index: {1}]
  %9 = xla_tuple %s7, %s8
  %s10 = sld [smem:[#allocation0]]
  $region46: #{tpu_custom_call.1} parent=0
    _
  %s12 = ssub.s32 1, %s10
  %s13 = scalar_select 0, %s12, %s10
  %v14 = vstv %s6
  %15 = vst [vmem:[#allocation2] sm:$0x1] %v14
  // Predicated region
  $region2: #{tpu_custom_call.1} parent=0 // pred_check
    _
  $region3: #{tpu_custom_call.1} parent=0 // pred_check_branch
    %17 = sbr.rel (0) target = $region5
  $region4: #{tpu_custom_call.1} parent=0 // pred_region
    _
  $region5: #{tpu_custom_call.1} parent=0 // pred_fallthru
    _
  // Predicated region
  $region6: #{tpu_custom_call.1} parent=0 // pred_check
    _
  $region7: #{tpu_custom_call.1} parent=0 // pred_check_branch
    %19 = sbr.rel (0) target = $region9
  $region8: #{tpu_custom_call.1} parent=0 // pred_region
    _
  $region9: #{tpu_custom_call.1} parent=0 // pred_fallthru
    _
  // Predicated region
  $region10: #{tpu_custom_call.1} parent=0 // pred_check
    _
  $region11: #{tpu_custom_call.1} parent=0 // pred_check_branch
    %21 = sbr.rel (0) target = $region13
  $region12: #{tpu_custom_call.1} parent=0 // pred_region
    _
  $region13: #{tpu_custom_call.1} parent=0 // pred_fallthru
    _
  // Predicated region
  $region14: #{tpu_custom_call.1} parent=0 // pred_check
    _
  $region15: #{tpu_custom_call.1} parent=0 // pred_check_branch
    %23 = sbr.rel (0) target = $region17
  $region16: #{tpu_custom_call.1} parent=0 // pred_region
    _
  $region17: #{tpu_custom_call.1} parent=0 // pred_fallthru
    _
  // Predicated region
  $region18: #{tpu_custom_call.1} parent=0 // pred_check
    _
  $region19: #{tpu_custom_call.1} parent=0 // pred_check_branch
    %25 = sbr.rel (0) target = $region21
  $region20: #{tpu_custom_call.1} parent=0 // pred_region
    _
  $region21: #{tpu_custom_call.1} parent=0 // pred_fallthru
    _
  // Predicated region
  $region22: #{tpu_custom_call.1} parent=0 // pred_check
    _
  $region23: #{tpu_custom_call.1} parent=0 // pred_check_branch
    %27 = sbr.rel (0) target = $region25
  $region24: #{tpu_custom_call.1} parent=0 // pred_region
    _
  $region25: #{tpu_custom_call.1} parent=0 // pred_fallthru
    _
  // Predicated region
  $region26: #{tpu_custom_call.1} parent=0 // pred_check
    _
  $region27: #{tpu_custom_call.1} parent=0 // pred_check_branch
    %29 = sbr.rel (0) target = $region29
  $region28: #{tpu_custom_call.1} parent=0 // pred_region
    _
  $region29: #{tpu_custom_call.1} parent=0 // pred_fallthru
    _
  %v30 = vld [vmem:[%s0] sm:$0xff]
  %v31 = vld [vmem:[%s1] sm:$0xff]
  %v32 = vld [vmem:[%s2] sm:$0x1]
  %v34 = vlaneseq
  %v35 = vshrl.u32 %v34, 7
  %v36 = vsub.s32 0, %v35
  %v37 = vrot.slane %v32, %v36
  %vm39 = vcmask 64512
  %v41 = vsel %vm39, %v30, 0
  %43 = vmatprep.subr.mxu0 0.0
  %44 = vmatpush1.msra.mxu0 %v31
  %45 = vmatprep.subr.mxu0 0.0
  %46 = vmatpush1.msra.mxu0 0.0
  %47 = vmatprep.subr.mxu0 0.0
  %48 = vmatpush1.msra.mxu0 0.0
  %49 = vmatprep.subr.mxu0 0.0
  %50 = vmatpush1.msra.mxu0 0.0
  %51 = vmatprep.subr.mxu0 0.0
  %52 = vmatpush1.msra.mxu0 0.0
  %53 = vmatprep.subr.mxu0 0.0
  %54 = vmatpush1.msra.mxu0 0.0
  %55 = vmatprep.subr.mxu0 0.0
  %56 = vmatpush1.msra.mxu0 0.0
  %57 = vmatprep.subr.mxu0 0.0
  %58 = vmatpush1.msra.mxu0 0.0
  %59 = vmatprep.subr.mxu0 0.0
  %60 = vmatpush1.msra.mxu0 0.0
  %61 = vmatprep.subr.mxu0 0.0
  %62 = vmatpush1.msra.mxu0 0.0
  %63 = vmatprep.subr.mxu0 0.0
  %64 = vmatpush1.msra.mxu0 0.0
  %65 = vmatprep.subr.mxu0 0.0
  %66 = vmatpush1.msra.mxu0 0.0
  %67 = vmatprep.subr.mxu0 0.0
  %68 = vmatpush1.msra.mxu0 0.0
  %69 = vmatprep.subr.mxu0 0.0
  %70 = vmatpush1.msra.mxu0 0.0
  %71 = vmatprep.subr.mxu0 0.0
  %72 = vmatpush1.msra.mxu0 0.0
  %73 = vmatprep.subr.mxu0 0.0
  %74 = vmatpush1.msra.mxu0 0.0
  %75 = vmatprep.subr.mxu0 0.0
  %76 = vmatpush1.msra.mxu0 0.0
  %77 = vmatprep.subr.mxu0 0.0
  %78 = vmatpush1.msra.mxu0 0.0
  %79 = vmatprep.subr.mxu0 0.0
  %80 = vmatpush1.msra.mxu0 0.0
  %81 = vmatprep.subr.mxu0 0.0
  %82 = vmatpush1.msra.mxu0 0.0
  %83 = vmatprep.subr.mxu0 0.0
  %84 = vmatpush1.msra.mxu0 0.0
  %85 = vmatprep.subr.mxu0 0.0
  %86 = vmatpush1.msra.mxu0 0.0
  %87 = vmatprep.subr.mxu0 0.0
  %88 = vmatpush1.msra.mxu0 0.0
  %89 = vmatprep.subr.mxu0 0.0
  %90 = vmatpush1.msra.mxu0 0.0
  %91 = vmatprep.subr.mxu0 0.0
  %92 = vmatpush1.msra.mxu0 0.0
  %93 = vmatprep.subr.mxu0 0.0
  %94 = vmatpush1.msra.mxu0 0.0
  %95 = vmatprep.subr.mxu0 0.0
  %96 = vmatpush1.msra.mxu0 0.0
  %97 = vmatprep.subr.mxu0 0.0
  %98 = vmatpush1.msra.mxu0 0.0
  %99 = vmatprep.subr.mxu0 0.0
  %100 = vmatpush1.msra.mxu0 0.0
  %101 = vmatprep.subr.mxu0 0.0
  %102 = vmatpush1.msra.mxu0 0.0
  %103 = vmatprep.subr.mxu0 0.0
  %104 = vmatpush1.msra.mxu0 0.0
  %105 = vmatprep.subr.mxu0 0.0
  %106 = vmatpush1.msra.mxu0 0.0
  %107 = vmatprep.mubr.f32.mxu0 0.0
  %108 = vmatmul.mubr.f32.gmra.mrb[0].mxu0 %v41
  %v109 = vpop.f32.mrb[0].mxu0
  %v110 = vadd.f32 %v37, %v109
  %v111 = vpop.f32.mrb[0].mxu0
  %112 = vdwg.mxu0
  %v113 = vmax.f32 %v110, 0.0
  %v114 = vld [vmem:[%s3] sm:$0xff]
  %v115 = vld [vmem:[%s3 + $0x8] sm:$0x3]
  %v116 = vld [vmem:[%s4] sm:$0x1]
  %v118 = vlaneseq
  %v119 = vshrl.u32 %v118, 7
  %v120 = vsub.s32 0, %v119
  %v121 = vrot.slane %v116, %v120
  %vm123 = vcmask 80896
  %v125 = vsel %vm123, %v113, 0
  %vm127 = vcmask 1041408
  %v129 = vsel %vm127, %v115, 0
  %131 = vmatprep.subr.mxu0 0.0
  %132 = vmatpush1.msra.mxu0 %v114
  %133 = vmatprep.subr.mxu0 0.0
  %134 = vmatpush1.msra.mxu0 %v129
  %135 = vmatprep.subr.mxu0 0.0
  %136 = vmatpush1.msra.mxu0 0.0
  %137 = vmatprep.subr.mxu0 0.0
  %138 = vmatpush1.msra.mxu0 0.0
  %139 = vmatprep.subr.mxu0 0.0
  %140 = vmatpush1.msra.mxu0 0.0
  %141 = vmatprep.subr.mxu0 0.0
  %142 = vmatpush1.msra.mxu0 0.0
  %143 = vmatprep.subr.mxu0 0.0
  %144 = vmatpush1.msra.mxu0 0.0
  %145 = vmatprep.subr.mxu0 0.0
  %146 = vmatpush1.msra.mxu0 0.0
  %147 = vmatprep.subr.mxu0 0.0
  %148 = vmatpush1.msra.mxu0 0.0
  %149 = vmatprep.subr.mxu0 0.0
  %150 = vmatpush1.msra.mxu0 0.0
  %151 = vmatprep.subr.mxu0 0.0
  %152 = vmatpush1.msra.mxu0 0.0
  %153 = vmatprep.subr.mxu0 0.0
  %154 = vmatpush1.msra.mxu0 0.0
  %155 = vmatprep.subr.mxu0 0.0
  %156 = vmatpush1.msra.mxu0 0.0
  %157 = vmatprep.subr.mxu0 0.0
  %158 = vmatpush1.msra.mxu0 0.0
  %159 = vmatprep.subr.mxu0 0.0
  %160 = vmatpush1.msra.mxu0 0.0
  %161 = vmatprep.subr.mxu0 0.0
  %162 = vmatpush1.msra.mxu0 0.0
  %163 = vmatprep.subr.mxu0 0.0
  %164 = vmatpush1.msra.mxu0 0.0
  %165 = vmatprep.subr.mxu0 0.0
  %166 = vmatpush1.msra.mxu0 0.0
  %167 = vmatprep.subr.mxu0 0.0
  %168 = vmatpush1.msra.mxu0 0.0
  %169 = vmatprep.subr.mxu0 0.0
  %170 = vmatpush1.msra.mxu0 0.0
  %171 = vmatprep.subr.mxu0 0.0
  %172 = vmatpush1.msra.mxu0 0.0
  %173 = vmatprep.subr.mxu0 0.0
  %174 = vmatpush1.msra.mxu0 0.0
  %175 = vmatprep.subr.mxu0 0.0
  %176 = vmatpush1.msra.mxu0 0.0
  %177 = vmatprep.subr.mxu0 0.0
  %178 = vmatpush1.msra.mxu0 0.0
  %179 = vmatprep.subr.mxu0 0.0
  %180 = vmatpush1.msra.mxu0 0.0
  %181 = vmatprep.subr.mxu0 0.0
  %182 = vmatpush1.msra.mxu0 0.0
  %183 = vmatprep.subr.mxu0 0.0
  %184 = vmatpush1.msra.mxu0 0.0
  %185 = vmatprep.subr.mxu0 0.0
  %186 = vmatpush1.msra.mxu0 0.0
  %187 = vmatprep.subr.mxu0 0.0
  %188 = vmatpush1.msra.mxu0 0.0
  %189 = vmatprep.subr.mxu0 0.0
  %190 = vmatpush1.msra.mxu0 0.0
  %191 = vmatprep.subr.mxu0 0.0
  %192 = vmatpush1.msra.mxu0 0.0
  %193 = vmatprep.subr.mxu0 0.0
  %194 = vmatpush1.msra.mxu0 0.0
  %195 = vmatprep.mubr.f32.mxu0 0.0
  %196 = vmatmul.mubr.f32.gmra.mrb[0].mxu0 %v125
  %v197 = vpop.f32.mrb[0].mxu0
  %v198 = vadd.f32 %v121, %v197
  %v199 = vpop.f32.mrb[0].mxu0
  %200 = vdwg.mxu0
  %vm201 = vcmask 31744
  %v202 = vsel %vm201, %v198, -inf
  %203 = vmax.xlane.f32.xlu0 %v202
  %v204 = vpop.xlane.xlu0 %203
  %v205 = vsub.f32 %v198, %v204
  %v206 = vmul.f32 %v205, 1.442695
  %v207 = vpow.pop %v206
  %v208 = vsel %vm201, %v207, 0.0
  %209 = vadd.xlane.f32.xlu0 %v208
  %v210 = vpop.xlane.xlu0 %209
  %v211 = vrcp.pop %v210
  %v212 = vmul.f32 %v207, %v211
  %213 = vst.msk [vmem:[%s7] sm:$0xff] %vm201, %v212
  %v214 = vld [vmem:[%s5] sm:$0xff]
  %v215 = vld [vmem:[%s5 + $0x8] sm:$0x3]
  %v216 = vld [vmem:[#allocation2] sm:$0x1]
  %v218 = vlaneseq
  %v219 = vshrl.u32 %v218, 7
  %v220 = vsub.s32 0, %v219
  %v221 = vrot.slane %v216, %v220
  %v224 = vsel %vm127, %v215, 0
  %226 = vmatprep.subr.mxu0 0.0
  %227 = vmatpush1.msra.mxu0 %v214
  %228 = vmatprep.subr.mxu0 0.0
  %229 = vmatpush1.msra.mxu0 %v224
  %230 = vmatprep.subr.mxu0 0.0
  %231 = vmatpush1.msra.mxu0 0.0
  %232 = vmatprep.subr.mxu0 0.0
  %233 = vmatpush1.msra.mxu0 0.0
  %234 = vmatprep.subr.mxu0 0.0
  %235 = vmatpush1.msra.mxu0 0.0
  %236 = vmatprep.subr.mxu0 0.0
  %237 = vmatpush1.msra.mxu0 0.0
  %238 = vmatprep.subr.mxu0 0.0
  %239 = vmatpush1.msra.mxu0 0.0
  %240 = vmatprep.subr.mxu0 0.0
  %241 = vmatpush1.msra.mxu0 0.0
  %242 = vmatprep.subr.mxu0 0.0
  %243 = vmatpush1.msra.mxu0 0.0
  %244 = vmatprep.subr.mxu0 0.0
  %245 = vmatpush1.msra.mxu0 0.0
  %246 = vmatprep.subr.mxu0 0.0
  %247 = vmatpush1.msra.mxu0 0.0
  %248 = vmatprep.subr.mxu0 0.0
  %249 = vmatpush1.msra.mxu0 0.0
  %250 = vmatprep.subr.mxu0 0.0
  %251 = vmatpush1.msra.mxu0 0.0
  %252 = vmatprep.subr.mxu0 0.0
  %253 = vmatpush1.msra.mxu0 0.0
  %254 = vmatprep.subr.mxu0 0.0
  %255 = vmatpush1.msra.mxu0 0.0
  %256 = vmatprep.subr.mxu0 0.0
  %257 = vmatpush1.msra.mxu0 0.0
  %258 = vmatprep.subr.mxu0 0.0
  %259 = vmatpush1.msra.mxu0 0.0
  %260 = vmatprep.subr.mxu0 0.0
  %261 = vmatpush1.msra.mxu0 0.0
  %262 = vmatprep.subr.mxu0 0.0
  %263 = vmatpush1.msra.mxu0 0.0
  %264 = vmatprep.subr.mxu0 0.0
  %265 = vmatpush1.msra.mxu0 0.0
  %266 = vmatprep.subr.mxu0 0.0
  %267 = vmatpush1.msra.mxu0 0.0
  %268 = vmatprep.subr.mxu0 0.0
  %269 = vmatpush1.msra.mxu0 0.0
  %270 = vmatprep.subr.mxu0 0.0
  %271 = vmatpush1.msra.mxu0 0.0
  %272 = vmatprep.subr.mxu0 0.0
  %273 = vmatpush1.msra.mxu0 0.0
  %274 = vmatprep.subr.mxu0 0.0
  %275 = vmatpush1.msra.mxu0 0.0
  %276 = vmatprep.subr.mxu0 0.0
  %277 = vmatpush1.msra.mxu0 0.0
  %278 = vmatprep.subr.mxu0 0.0
  %279 = vmatpush1.msra.mxu0 0.0
  %280 = vmatprep.subr.mxu0 0.0
  %281 = vmatpush1.msra.mxu0 0.0
  %282 = vmatprep.subr.mxu0 0.0
  %283 = vmatpush1.msra.mxu0 0.0
  %284 = vmatprep.subr.mxu0 0.0
  %285 = vmatpush1.msra.mxu0 0.0
  %286 = vmatprep.subr.mxu0 0.0
  %287 = vmatpush1.msra.mxu0 0.0
  %288 = vmatprep.subr.mxu0 0.0
  %289 = vmatpush1.msra.mxu0 0.0
  %290 = vmatprep.mubr.f32.mxu0 0.0
  %291 = vmatmul.mubr.f32.gmra.mrb[0].mxu0 %v125
  %v292 = vpop.f32.mrb[0].mxu0
  %v293 = vadd.f32 %v221, %v292
  %v294 = vpop.f32.mrb[0].mxu0
  %295 = vdwg.mxu0
  %vm296 = vcmask 7168
  %297 = vst.msk [vmem:[%s8] sm:$0xff] %vm296, %v293
  // Predicated region
  $region30: #{tpu_custom_call.1} parent=0 // pred_check
    _
  $region31: #{tpu_custom_call.1} parent=0 // pred_check_branch
    %299 = sbr.rel (0) target = $region33
  $region32: #{tpu_custom_call.1} parent=0 // pred_region
    _
  $region33: #{tpu_custom_call.1} parent=0 // pred_fallthru
    _
  // Predicated region
  $region34: #{tpu_custom_call.1} parent=0 // pred_check
    _
  $region35: #{tpu_custom_call.1} parent=0 // pred_check_branch
    %301 = sbr.rel (0) target = $region37
  $region36: #{tpu_custom_call.1} parent=0 // pred_region
    _
  $region37: #{tpu_custom_call.1} parent=0 // pred_fallthru
    _
  // Predicated region
  $region38: #{tpu_custom_call.1} parent=0 // pred_check
    _
  $region39: #{tpu_custom_call.1} parent=0 // pred_check_branch
    %303 = sbr.rel (0) target = $region41
  $region40: #{tpu_custom_call.1} parent=0 // pred_region
    _
  $region41: #{tpu_custom_call.1} parent=0 // pred_fallthru
    _
  // Predicated region
  $region42: #{tpu_custom_call.1} parent=0 // pred_check
    _
  $region43: #{tpu_custom_call.1} parent=0 // pred_check_branch
    %305 = sbr.rel (0) target = $region45
  $region44: #{tpu_custom_call.1} parent=0 // pred_region
    _
  $region45: #{tpu_custom_call.1} parent=0 // pred_fallthru
    _

</llo_original>
